<compile_context>
chip_gen: v7x
topology: tpu7x:2x2x1
jax: 0.10.0
libtpu: 0.0.40
codegen_flags: <defaults>
</compile_context>

<pallas_src>
import math
from functools import partial

import jax
import jax.numpy as jnp
from jax.experimental import pallas as pl
from jax.experimental.pallas import tpu as pltpu

_LANE = 128


def _round_up(x, n):
    return ((x + n - 1) // n) * n


def _pick_tile_pixels(hw_pad, cap=2048):
    """Largest divisor of hw_pad that is a multiple of 128 and <= cap lanes."""
    n = hw_pad // _LANE
    best = 1
    for d in range(1, n + 1):
        if n % d == 0 and d * _LANE <= cap:
            best = d
    return best * _LANE


def _nchw_to_cpix(x, hw_pad):
    """[B, C, H, W] -> [B, C, HW_pad] (free reshape + zero pad on the lane axis)."""
    b, c, h, w = x.shape
    x = x.reshape(b, c, h * w)
    if hw_pad != h * w:
        x = jnp.pad(x, ((0, 0), (0, 0), (0, hw_pad - h * w)))
    return x


def _pack_params(raw, c_in):
    """Transpose weights for the (channels-on-sublanes, pixels-on-lanes) layout.

    w1 (2C, HID) is split into its seismic / logCube halves and transposed to
    (HID_pad8, C); w2 (HID, COUT) becomes (COUT_pad8, HID_pad8); biases become
    column vectors.  Zero padding keeps the forward pass and EMA exact.
    """
    w1 = jnp.asarray(raw["w1"], jnp.float32)                 # (2*C, HID)
    b1 = jnp.asarray(raw["b1"], jnp.float32).reshape(-1)     # (HID,)
    w2 = jnp.asarray(raw["w2"], jnp.float32)                 # (HID, COUT)
    b2 = jnp.asarray(raw["b2"], jnp.float32).reshape(-1)     # (COUT,)
    hid = w1.shape[1]
    cout = w2.shape[1]
    hp = _round_up(hid, 8)
    cp = _round_up(cout, 8)

    def pad2(a, rows, cols):
        return jnp.pad(a, ((0, rows - a.shape[0]), (0, cols - a.shape[1])))

    return {
        "w1s": pad2(w1[:c_in].T, hp, c_in),      # (hid_pad, C)  seismic half
        "w1l": pad2(w1[c_in:].T, hp, c_in),      # (hid_pad, C)  logCube half
        "b1": pad2(b1.reshape(-1, 1), hp, 1),    # (hid_pad, 1)
        "w2": pad2(w2.T, cp, hp),                # (cout_pad, hid_pad)
        "b2": pad2(b2.reshape(-1, 1), cp, 1),    # (cout_pad, 1)
    }


# ----------------------------------------------------------------------------
# Kernel: pointwise-MLP encoder, run twice (student pass p=0, teacher pass p=1).
# Grid = (B, pixel_tiles, 2).  Parameter blocks are selected by the pass index
# via their index_map; seismic/logCube tiles are pass-invariant (DMA'd once per
# pixel tile, reused across both passes).
# ----------------------------------------------------------------------------
def _mt_encoder_kernel(seis_s_ref, seis_w_ref, log_ref,
                       w1s_ref, w1l_ref, b1_ref, w2_ref, b2_ref,
                       out_ref, feat_ref):
    is_teacher = pl.program_id(2) == 1
    x = jnp.where(is_teacher, seis_w_ref[...], seis_s_ref[...])      # (C, tm)

    # concat(seismic, logCube) over channels expressed as two K=C matmuls
    h = jnp.dot(w1s_ref[...], x, preferred_element_type=jnp.float32)            # (HID, tm)
    h = h + jnp.dot(w1l_ref[...], log_ref[...], preferred_element_type=jnp.float32)
    feat = jnp.maximum(h + b1_ref[...], 0.0)
    feat_ref[...] = feat.astype(feat_ref.dtype)

    out = jnp.dot(w2_ref[...], feat, preferred_element_type=jnp.float32) + b2_ref[...]
    out_ref[...] = out.astype(out_ref.dtype)


@partial(jax.jit, static_argnames=("hid", "cout"))
def _mean_teacher_step(m_arr, seismic_w, seismic_s, log_cube, params_q, params_k,
                       *, hid, cout):
    B, C, H, W = seismic_s.shape
    hw = H * W
    hid_pad = params_q["b1"].shape[0]
    cout_pad = params_q["b2"].shape[0]

    hw_pad = _round_up(hw, _LANE)
    tm = _pick_tile_pixels(hw_pad)
    nt = hw_pad // tm

    seis_s3 = _nchw_to_cpix(seismic_s, hw_pad)
    seis_w3 = _nchw_to_cpix(seismic_w, hw_pad)
    log3 = _nchw_to_cpix(log_cube, hw_pad)

    # --- EMA / momentum update of the teacher ("key") encoder -----------------
    #   param_k_new = param_k * m + param_q * (1 - m)
    # Done in plain XLA (params are tiny), so the kernel grid stays fully
    # parallel and nothing is recomputed / re-stored per grid step.
    m = m_arr[0]
    new_k = jax.tree_util.tree_map(lambda kp, qp: kp * m + qp * (1.0 - m),
                                   params_k, params_q)

    # Stack student / updated-teacher params on a leading "pass" axis; the
    # kernel's index_map picks the right set (p=0 student, p=1 teacher).
    def stacked(name):
        return jnp.stack([params_q[name], new_k[name]], axis=0)

    w1s_all = stacked("w1s")
    w1l_all = stacked("w1l")
    b1_all = stacked("b1")
    w2_all = stacked("w2")
    b2_all = stacked("b2")

    act_spec = pl.BlockSpec((None, C, tm), lambda b, i, p: (b, 0, i))
    param_specs = [
        pl.BlockSpec((None, hid_pad, C), lambda b, i, p: (p, 0, 0)),    # w1s
        pl.BlockSpec((None, hid_pad, C), lambda b, i, p: (p, 0, 0)),    # w1l
        pl.BlockSpec((None, hid_pad, 1), lambda b, i, p: (p, 0, 0)),    # b1
        pl.BlockSpec((None, cout_pad, hid_pad), lambda b, i, p: (p, 0, 0)),  # w2
        pl.BlockSpec((None, cout_pad, 1), lambda b, i, p: (p, 0, 0)),   # b2
    ]

    out_all, feat_all = pl.pallas_call(
        _mt_encoder_kernel,
        out_shape=(
            jax.ShapeDtypeStruct((2, B, cout_pad, hw_pad), jnp.float32),  # out
            jax.ShapeDtypeStruct((2, B, hid_pad, hw_pad), jnp.float32),   # feat
        ),
        grid_spec=pltpu.PrefetchScalarGridSpec(
            num_scalar_prefetch=0,
            grid=(B, nt, 2),
            in_specs=[act_spec, act_spec, act_spec, *param_specs],
            out_specs=[
                pl.BlockSpec((None, None, cout_pad, tm), lambda b, i, p: (p, b, 0, i)),
                pl.BlockSpec((None, None, hid_pad, tm), lambda b, i, p: (p, b, 0, i)),
            ],
        ),
        compiler_params=pltpu.CompilerParams(
            dimension_semantics=("parallel", "parallel", "arbitrary")),
    )(seis_s3, seis_w3, log3, w1s_all, w1l_all, b1_all, w2_all, b2_all)

    # NCHW comes back for free: slice the channel / pixel padding, reshape.
    out_s = out_all[0, :, :cout, :hw].reshape(B, cout, H, W)
    feat_s = feat_all[0, :, :hid, :hw].reshape(B, hid, H, W)
    out_w = out_all[1, :, :cout, :hw].reshape(B, cout, H, W)
    feat_w = feat_all[1, :, :hid, :hw].reshape(B, hid, H, W)

    # Teacher branch runs under torch.no_grad() in the reference module.
    out_w = jax.lax.stop_gradient(out_w)
    feat_w = jax.lax.stop_gradient(feat_w)
    new_k = jax.lax.stop_gradient(new_k)
    return out_s, feat_s, out_w, feat_w, new_k


# ----------------------------------------------------------------------------
# MeanTeacher
# ----------------------------------------------------------------------------
class MeanTeacher:
    """JAX/Pallas port of MeanTeacher with a synthetic pointwise-MLP backbone."""

    def __init__(self, raw_params_q, momentum, all_steps, in_channels):
        self.pixpro_momentum = float(momentum)
        self.contras_step = float(all_steps)
        self.in_channels = int(in_channels)
        self.hid = int(raw_params_q["w1"].shape[1])
        self.cout = int(raw_params_q["w2"].shape[1])
        # student ("encoder") params, transposed/padded for the lane-dense layout
        self.params_q = _pack_params(raw_params_q, self.in_channels)
        # teacher ("encoder_k") initialized as an exact copy (param_k.copy_(param_q))
        self.params_k = jax.tree_util.tree_map(jnp.array, self.params_q)

    def _contrast_momentum(self, idx):
        return 1.0 - (1.0 - self.pixpro_momentum) * (
            math.cos(math.pi * float(idx) / self.contras_step) + 1.0) / 2.0

    def forward(self, idx, seismic_w, seismic_s, log_cube):
        m_arr = jnp.asarray([self._contrast_momentum(idx)], dtype=jnp.float32)
        out_s, feat_s, out_w, feat_w, new_k = _mean_teacher_step(
            m_arr, seismic_w, seismic_s, log_cube,
            self.params_q, self.params_k, hid=self.hid, cout=self.cout)
        self.params_k = new_k
        return out_s, feat_s, out_w, feat_w


# ----------------------------------------------------------------------------
# Pure-JAX reference (for correctness checking)
# ----------------------------------------------------------------------------
def _reference_encoder(seismic, log_cube, raw_params):
    B, C, H, W = seismic.shape
    x = jnp.concatenate([seismic, log_cube], axis=1)
    x = jnp.transpose(x, (0, 2, 3, 1)).reshape(B * H * W, 2 * C)
    h = jnp.maximum(x @ raw_params["w1"] + raw_params["b1"].reshape(1, -1), 0.0)
    o = h @ raw_params["w2"] + raw_params["b2"].reshape(1, -1)
    hid = raw_params["w1"].shape[1]
    cout = raw_params["w2"].shape[1]
    out = jnp.transpose(o.reshape(B, H, W, cout), (0, 3, 1, 2))
    feat = jnp.transpose(h.reshape(B, H, W, hid), (0, 3, 1, 2))
    return out, feat


def _close(a, b, rtol=1e-3, atol=1e-3):
    return bool(jnp.allclose(a, b, rtol=rtol, atol=atol))


# ----------------------------------------------------------------------------
# main
# ----------------------------------------------------------------------------
if __name__ == "__main__":
    key = jax.random.PRNGKey(0)
    B, C, H, W = 2, 4, 16, 16        # seismic / logCube: [B, C, H, W]
    CIN = 2 * C                      # concat(seismic, logCube) channels
    HID = 32
    COUT = 4

    k1, k2, k3, k4, k5, k6, k7 = jax.random.split(key, 7)
    raw_q = {
        "w1": jax.random.normal(k1, (CIN, HID), jnp.float32) * 0.1,
        "b1": jax.random.normal(k2, (1, HID), jnp.float32) * 0.01,
        "w2": jax.random.normal(k3, (HID, COUT), jnp.float32) * 0.1,
        "b2": jax.random.normal(k4, (1, COUT), jnp.float32) * 0.01,
    }

    class Args:
        momentum = 0.99
        all_steps = 1000

    model = MeanTeacher(raw_q, Args.momentum, Args.all_steps, in_channels=C)

    seismic_w = jax.random.normal(k5, (B, C, H, W), jnp.float32)
    seismic_s = jax.random.normal(k6, (B, C, H, W), jnp.float32)
    log_cube = jax.random.normal(k7, (B, C, H, W), jnp.float32)

    # ---- step 1: teacher params start as an exact copy of the student ----------
    idx0 = 10
    o_s, f_s, o_w, f_w = model.forward(idx0, seismic_w, seismic_s, log_cube)
    jax.block_until_ready((o_s, f_s, o_w, f_w, model.params_k))

    assert o_s.shape == (B, COUT, H, W)
    assert f_s.shape == (B, HID, H, W)
    assert o_w.shape == (B, COUT, H, W)
    assert f_w.shape == (B, HID, H, W)

    ref_os, ref_fs = _reference_encoder(seismic_s, log_cube, raw_q)
    ref_ow, ref_fw = _reference_encoder(seismic_w, log_cube, raw_q)  # k == q at step 0
    assert _close(o_s, ref_os) and _close(f_s, ref_fs)
    assert _close(o_w, ref_ow) and _close(f_w, ref_fw)

    # ---- step 2: perturb the student so the EMA path is actually exercised -----
    raw_q2 = {k: v * 1.05 + 0.01 for k, v in raw_q.items()}
    model.params_q = _pack_params(raw_q2, C)
    idx1 = 20
    m1 = model._contrast_momentum(idx1)
    raw_k1 = {k: raw_q[k] * m1 + raw_q2[k] * (1.0 - m1) for k in raw_q}  # ref EMA

    o_s2, f_s2, o_w2, f_w2 = model.forward(idx1, seismic_w, seismic_s, log_cube)
    jax.block_until_ready((o_s2, f_s2, o_w2, f_w2, model.params_k))

    ref_os2, ref_fs2 = _reference_encoder(seismic_s, log_cube, raw_q2)
    ref_ow2, ref_fw2 = _reference_encoder(seismic_w, log_cube, raw_k1)
    assert _close(o_s2, ref_os2) and _close(f_s2, ref_fs2)
    assert _close(o_w2, ref_ow2) and _close(f_w2, ref_fw2)

    packed_k1 = _pack_params(raw_k1, C)
    for name in packed_k1:
        assert _close(model.params_k[name], packed_k1[name], rtol=1e-5, atol=1e-5)

    print("KERNEL_OK")
</pallas_src>

<mosaic_0001>
module attributes {stable_mosaic.version = 11 : i64} {
  func.func @_mt_encoder_kernel(%arg0: i32, %arg1: i32, %arg2: i32, %arg3: memref<1x4x256xf32, #tpu.memory_space<vmem>>, %arg4: memref<1x4x256xf32, #tpu.memory_space<vmem>>, %arg5: memref<1x4x256xf32, #tpu.memory_space<vmem>>, %arg6: memref<1x32x4xf32, #tpu.memory_space<vmem>>, %arg7: memref<1x32x4xf32, #tpu.memory_space<vmem>>, %arg8: memref<1x32x1xf32, #tpu.memory_space<vmem>>, %arg9: memref<1x8x32xf32, #tpu.memory_space<vmem>>, %arg10: memref<1x8x1xf32, #tpu.memory_space<vmem>>, %arg11: memref<1x1x8x256xf32, #tpu.memory_space<vmem>>, %arg12: memref<1x1x32x256xf32, #tpu.memory_space<vmem>>) attributes {dimension_semantics = [#tpu.dimension_semantics<parallel>, #tpu.dimension_semantics<parallel>, #tpu.dimension_semantics<arbitrary>], iteration_bounds = array<i64: 2, 1, 2>, scalar_prefetch = 0 : i64, scratch_operands = 0 : i64, tpu.core_type = #tpu.core_type<tc>, window_params = [{transform_indices = @transform_0, window_bounds = array<i64: 1, 4, 256>}, {transform_indices = @transform_1, window_bounds = array<i64: 1, 4, 256>}, {transform_indices = @transform_2, window_bounds = array<i64: 1, 4, 256>}, {transform_indices = @transform_3, window_bounds = array<i64: 1, 32, 4>}, {transform_indices = @transform_4, window_bounds = array<i64: 1, 32, 4>}, {transform_indices = @transform_5, window_bounds = array<i64: 1, 32, 1>}, {transform_indices = @transform_6, window_bounds = array<i64: 1, 8, 32>}, {transform_indices = @transform_7, window_bounds = array<i64: 1, 8, 1>}, {transform_indices = @transform_8, window_bounds = array<i64: 1, 1, 8, 256>}, {transform_indices = @transform_9, window_bounds = array<i64: 1, 1, 32, 256>}]} {
    %c1_i32 = arith.constant 1 : i32
    %0 = arith.cmpi eq, %arg2, %c1_i32 : i32
    %c0 = arith.constant 0 : index
    %c0_0 = arith.constant 0 : index
    %c0_1 = arith.constant 0 : index
    %1 = vector.load %arg4[%c0, %c0_0, %c0_1] : memref<1x4x256xf32, #tpu.memory_space<vmem>>, vector<1x4x256xf32>
    %2 = vector.shape_cast %1 : vector<1x4x256xf32> to vector<4x256xf32>
    %c0_2 = arith.constant 0 : index
    %c0_3 = arith.constant 0 : index
    %c0_4 = arith.constant 0 : index
    %3 = vector.load %arg3[%c0_2, %c0_3, %c0_4] : memref<1x4x256xf32, #tpu.memory_space<vmem>>, vector<1x4x256xf32>
    %4 = vector.shape_cast %3 : vector<1x4x256xf32> to vector<4x256xf32>
    %5 = arith.select %0, %2, %4 : vector<4x256xf32>
    %c0_5 = arith.constant 0 : index
    %c0_6 = arith.constant 0 : index
    %c0_7 = arith.constant 0 : index
    %6 = vector.load %arg6[%c0_5, %c0_6, %c0_7] : memref<1x32x4xf32, #tpu.memory_space<vmem>>, vector<1x32x4xf32>
    %7 = vector.shape_cast %6 : vector<1x32x4xf32> to vector<32x4xf32>
    %cst = arith.constant dense<0.000000e+00> : vector<32x256xf32>
    %8 = tpu.matmul %7, %5, %cst {dimension_numbers = #tpu.dot_dimension_numbers<[1], [0], [0], [1], [0, 0, 1, 1], [], []>} : vector<32x4xf32>, vector<4x256xf32>, vector<32x256xf32> -> vector<32x256xf32>
    %c0_8 = arith.constant 0 : index
    %c0_9 = arith.constant 0 : index
    %c0_10 = arith.constant 0 : index
    %9 = vector.load %arg7[%c0_8, %c0_9, %c0_10] : memref<1x32x4xf32, #tpu.memory_space<vmem>>, vector<1x32x4xf32>
    %10 = vector.shape_cast %9 : vector<1x32x4xf32> to vector<32x4xf32>
    %c0_11 = arith.constant 0 : index
    %c0_12 = arith.constant 0 : index
    %c0_13 = arith.constant 0 : index
    %11 = vector.load %arg5[%c0_11, %c0_12, %c0_13] : memref<1x4x256xf32, #tpu.memory_space<vmem>>, vector<1x4x256xf32>
    %12 = vector.shape_cast %11 : vector<1x4x256xf32> to vector<4x256xf32>
    %cst_14 = arith.constant dense<0.000000e+00> : vector<32x256xf32>
    %13 = tpu.matmul %10, %12, %cst_14 {dimension_numbers = #tpu.dot_dimension_numbers<[1], [0], [0], [1], [0, 0, 1, 1], [], []>} : vector<32x4xf32>, vector<4x256xf32>, vector<32x256xf32> -> vector<32x256xf32>
    %14 = arith.addf %8, %13 : vector<32x256xf32>
    %c0_15 = arith.constant 0 : index
    %c0_16 = arith.constant 0 : index
    %c0_17 = arith.constant 0 : index
    %15 = vector.load %arg8[%c0_15, %c0_16, %c0_17] : memref<1x32x1xf32, #tpu.memory_space<vmem>>, vector<1x32x1xf32>
    %16 = vector.shape_cast %15 : vector<1x32x1xf32> to vector<32x1xf32>
    %17 = vector.broadcast %16 : vector<32x1xf32> to vector<32x256xf32>
    %18 = arith.addf %14, %17 : vector<32x256xf32>
    %cst_18 = arith.constant 0.000000e+00 : f32
    %19 = vector.broadcast %cst_18 : f32 to vector<32x256xf32>
    %20 = arith.maximumf %18, %19 : vector<32x256xf32>
    %c0_19 = arith.constant 0 : index
    %c0_20 = arith.constant 0 : index
    %c0_21 = arith.constant 0 : index
    %c0_22 = arith.constant 0 : index
    %21 = vector.load %arg12[%c0_19, %c0_20, %c0_21, %c0_22] : memref<1x1x32x256xf32, #tpu.memory_space<vmem>>, vector<1x1x32x256xf32>
    %22 = vector.shape_cast %21 : vector<1x1x32x256xf32> to vector<32x256xf32>
    %23 = vector.shape_cast %20 : vector<32x256xf32> to vector<1x1x32x256xf32>
    tpu.vector_store %arg12[%c0_19, %c0_20, %c0_21, %c0_22], %23 {strides = array<i32>} : memref<1x1x32x256xf32, #tpu.memory_space<vmem>>, vector<1x1x32x256xf32>,
    %c0_23 = arith.constant 0 : index
    %c0_24 = arith.constant 0 : index
    %c0_25 = arith.constant 0 : index
    %24 = vector.load %arg9[%c0_23, %c0_24, %c0_25] : memref<1x8x32xf32, #tpu.memory_space<vmem>>, vector<1x8x32xf32>
    %25 = vector.shape_cast %24 : vector<1x8x32xf32> to vector<8x32xf32>
    %cst_26 = arith.constant dense<0.000000e+00> : vector<8x256xf32>
    %26 = tpu.matmul %25, %20, %cst_26 {dimension_numbers = #tpu.dot_dimension_numbers<[1], [0], [0], [1], [0, 0, 1, 1], [], []>} : vector<8x32xf32>, vector<32x256xf32>, vector<8x256xf32> -> vector<8x256xf32>
    %c0_27 = arith.constant 0 : index
    %c0_28 = arith.constant 0 : index
    %c0_29 = arith.constant 0 : index
    %27 = vector.load %arg10[%c0_27, %c0_28, %c0_29] : memref<1x8x1xf32, #tpu.memory_space<vmem>>, vector<1x8x1xf32>
    %28 = vector.shape_cast %27 : vector<1x8x1xf32> to vector<8x1xf32>
    %29 = vector.broadcast %28 : vector<8x1xf32> to vector<8x256xf32>
    %30 = arith.addf %26, %29 : vector<8x256xf32>
    %c0_30 = arith.constant 0 : index
    %c0_31 = arith.constant 0 : index
    %c0_32 = arith.constant 0 : index
    %c0_33 = arith.constant 0 : index
    %31 = vector.load %arg11[%c0_30, %c0_31, %c0_32, %c0_33] : memref<1x1x8x256xf32, #tpu.memory_space<vmem>>, vector<1x1x8x256xf32>
    %32 = vector.shape_cast %31 : vector<1x1x8x256xf32> to vector<8x256xf32>
    %33 = vector.shape_cast %30 : vector<8x256xf32> to vector<1x1x8x256xf32>
    tpu.vector_store %arg11[%c0_30, %c0_31, %c0_32, %c0_33], %33 {strides = array<i32>} : memref<1x1x8x256xf32, #tpu.memory_space<vmem>>, vector<1x1x8x256xf32>,
    return
  }
  func.func @transform_0(%arg0: i32, %arg1: i32, %arg2: i32) -> (i32, i32, i32) {
    %c0_i32 = arith.constant 0 : i32
    %c0_i32_0 = arith.constant 0 : i32
    return %arg0, %c0_i32, %arg1 : i32, i32, i32
  }
  func.func @transform_1(%arg0: i32, %arg1: i32, %arg2: i32) -> (i32, i32, i32) {
    %c0_i32 = arith.constant 0 : i32
    %c0_i32_0 = arith.constant 0 : i32
    return %arg0, %c0_i32, %arg1 : i32, i32, i32
  }
  func.func @transform_2(%arg0: i32, %arg1: i32, %arg2: i32) -> (i32, i32, i32) {
    %c0_i32 = arith.constant 0 : i32
    %c0_i32_0 = arith.constant 0 : i32
    return %arg0, %c0_i32, %arg1 : i32, i32, i32
  }
  func.func @transform_3(%arg0: i32, %arg1: i32, %arg2: i32) -> (i32, i32, i32) {
    %c0_i32 = arith.constant 0 : i32
    %c0_i32_0 = arith.constant 0 : i32
    %c0_i32_1 = arith.constant 0 : i32
    return %arg2, %c0_i32, %c0_i32_0 : i32, i32, i32
  }
  func.func @transform_4(%arg0: i32, %arg1: i32, %arg2: i32) -> (i32, i32, i32) {
    %c0_i32 = arith.constant 0 : i32
    %c0_i32_0 = arith.constant 0 : i32
    %c0_i32_1 = arith.constant 0 : i32
    return %arg2, %c0_i32, %c0_i32_0 : i32, i32, i32
  }
  func.func @transform_5(%arg0: i32, %arg1: i32, %arg2: i32) -> (i32, i32, i32) {
    %c0_i32 = arith.constant 0 : i32
    %c0_i32_0 = arith.constant 0 : i32
    %c0_i32_1 = arith.constant 0 : i32
    return %arg2, %c0_i32, %c0_i32_0 : i32, i32, i32
  }
  func.func @transform_6(%arg0: i32, %arg1: i32, %arg2: i32) -> (i32, i32, i32) {
    %c0_i32 = arith.constant 0 : i32
    %c0_i32_0 = arith.constant 0 : i32
    %c0_i32_1 = arith.constant 0 : i32
    return %arg2, %c0_i32, %c0_i32_0 : i32, i32, i32
  }
  func.func @transform_7(%arg0: i32, %arg1: i32, %arg2: i32) -> (i32, i32, i32) {
    %c0_i32 = arith.constant 0 : i32
    %c0_i32_0 = arith.constant 0 : i32
    %c0_i32_1 = arith.constant 0 : i32
    return %arg2, %c0_i32, %c0_i32_0 : i32, i32, i32
  }
  func.func @transform_8(%arg0: i32, %arg1: i32, %arg2: i32) -> (i32, i32, i32, i32) {
    %c0_i32 = arith.constant 0 : i32
    %c0_i32_0 = arith.constant 0 : i32
    return %arg2, %arg0, %c0_i32, %arg1 : i32, i32, i32, i32
  }
  func.func @transform_9(%arg0: i32, %arg1: i32, %arg2: i32) -> (i32, i32, i32, i32) {
    %c0_i32 = arith.constant 0 : i32
    %c0_i32_0 = arith.constant 0 : i32
    return %arg2, %arg0, %c0_i32, %arg1 : i32, i32, i32, i32
  }
}

</mosaic_0001>

<llo_original>
// kernel: squeeze.6
$region0: #{squeeze.6}
  %s0 = inlined_call_operand.vmem [shape: f32[1,2,4,256], index: 0, kind: input, shape index: {}]
  %s1 = inlined_call_operand.hbm [shape: f32[2,4,16,16], index: 1, kind: output, shape index: {}]
  $region1: #{squeeze.6} parent=0
    #allocation0 [shape = 'u8[65536]{0}', space=vmem, size = 0x10000, scoped, tag = 'operand span for operand 1']
    #allocation1 [shape = 's32[1]{0}', space=sflag, size = 0x4, scoped, tag = 'scoped memory for squeeze.6']
    #allocation2 [shape = 'u8[16384]{0}', space=vmem, size = 0x4000, scoped, tag = 'scoped mem for input reshape']
    %2 = vsyncpa [#allocation1], 0
    %s4 = sshllo.u32 0, 4
    %s5 = smul.addr 4, 3
    %s6 = scalar_lea.vmem %s0, %s5
    %v7 = vld [vmem:[%s6] sm:%s4]
    %s8 = scalar_lea.vmem [#allocation2], 24
    %9 = vst [vmem:[%s8] sm:%s4] %v7
    %s10 = smul.addr 4, 2
    %s11 = scalar_lea.vmem %s0, %s10
    %v12 = vld [vmem:[%s11] sm:%s4]
    %s13 = scalar_lea.vmem [#allocation2], 16
    %14 = vst [vmem:[%s13] sm:%s4] %v12
    %s15 = scalar_lea.vmem %s0, 4
    %v16 = vld [vmem:[%s15] sm:%s4]
    %s17 = scalar_lea.vmem [#allocation2], 8
    %18 = vst [vmem:[%s17] sm:%s4] %v16
    %v19 = vld [vmem:[%s0] sm:%s4]
    %20 = vst [vmem:[#allocation2] sm:%s4] %v19
    %v21 = vld [vmem:[#allocation2] sm:$0xf]
    %vm22 = vcmask 130048
    %23 = vst.msk [vmem:[#allocation0] ss:$16 sm:$0x3] %vm22, %v21
    %24 = vst.msk [vmem:[#allocation0] ss:$16 sm:$0xc] %vm22, %v21
    %s25 = scalar_lea.vmem [#allocation2], 8
    %v26 = vld [vmem:[%s25] sm:$0xf]
    %vm27 = vcmask 130048
    %s28 = scalar_lea.vmem [#allocation0], 8
    %29 = vst.msk [vmem:[%s28] ss:$16 sm:$0x3] %vm27, %v26
    %s30 = scalar_lea.vmem [#allocation0], 8
    %31 = vst.msk [vmem:[%s30] ss:$16 sm:$0xc] %vm27, %v26
    %s32 = scalar_lea.vmem [#allocation2], 16
    %v33 = vld [vmem:[%s32] sm:$0xf]
    %vm34 = vcmask 130048
    %s35 = scalar_lea.vmem [#allocation0], 64
    %36 = vst.msk [vmem:[%s35] ss:$16 sm:$0x3] %vm34, %v33
    %s37 = scalar_lea.vmem [#allocation0], 64
    %38 = vst.msk [vmem:[%s37] ss:$16 sm:$0xc] %vm34, %v33
    %s39 = scalar_lea.vmem [#allocation2], 24
    %v40 = vld [vmem:[%s39] sm:$0xf]
    %vm41 = vcmask 130048
    %s42 = scalar_lea.vmem [#allocation0], 72
    %43 = vst.msk [vmem:[%s42] ss:$16 sm:$0x3] %vm41, %v40
    %s44 = scalar_lea.vmem [#allocation0], 72
    %45 = vst.msk [vmem:[%s44] ss:$16 sm:$0xc] %vm41, %v40
    %v46 = vld.sshfl [vmem:[#allocation2] sm:$0xff pattern:$0xb3a29180]
    %47 = vrot.lane.b32.xlu0 %v46, 112
    %v48 = vpop.permute.xlu0 %47
    %vm49 = vcmask 130048
    %s50 = scalar_lea.vmem [#allocation0], 1
    %51 = vst.msk [vmem:[%s50] ss:$8 sm:$0xf] %vm49, %v48
    %s52 = scalar_lea.vmem [#allocation0], 1
    %53 = vst.msk [vmem:[%s52] ss:$8 sm:$0xf0] %vm49, %v48
    %s54 = scalar_lea.vmem [#allocation2], 16
    %v55 = vld.sshfl [vmem:[%s54] sm:$0xff pattern:$0xb3a29180]
    %56 = vrot.lane.b32.xlu0 %v55, 112
    %v57 = vpop.permute.xlu0 %56
    %vm58 = vcmask 130048
    %s59 = scalar_lea.vmem [#allocation0], 65
    %60 = vst.msk [vmem:[%s59] ss:$8 sm:$0xf] %vm58, %v57
    %s61 = scalar_lea.vmem [#allocation0], 65
    %62 = vst.msk [vmem:[%s61] ss:$8 sm:$0xf0] %vm58, %v57
    %v63 = vld.sshfl [vmem:[#allocation2] sm:$0xff pattern:$0xb3a29180]
    %64 = vrot.lane.b32.xlu0 %v63, 96
    %v65 = vpop.permute.xlu0 %64
    %vm66 = vcmask 130048
    %s67 = scalar_lea.vmem [#allocation0], 2
    %68 = vst.msk [vmem:[%s67] ss:$8 sm:$0xf] %vm66, %v65
    %s69 = scalar_lea.vmem [#allocation0], 2
    %70 = vst.msk [vmem:[%s69] ss:$8 sm:$0xf0] %vm66, %v65
    %s71 = scalar_lea.vmem [#allocation2], 16
    %v72 = vld.sshfl [vmem:[%s71] sm:$0xff pattern:$0xb3a29180]
    %73 = vrot.lane.b32.xlu0 %v72, 96
    %v74 = vpop.permute.xlu0 %73
    %vm75 = vcmask 130048
    %s76 = scalar_lea.vmem [#allocation0], 66
    %77 = vst.msk [vmem:[%s76] ss:$8 sm:$0xf] %vm75, %v74
    %s78 = scalar_lea.vmem [#allocation0], 66
    %79 = vst.msk [vmem:[%s78] ss:$8 sm:$0xf0] %vm75, %v74
    %v80 = vld.sshfl [vmem:[#allocation2] sm:$0xff pattern:$0xb3a29180]
    %81 = vrot.lane.b32.xlu0 %v80, 80
    %v82 = vpop.permute.xlu0 %81
    %vm83 = vcmask 130048
    %s84 = scalar_lea.vmem [#allocation0], 3
    %85 = vst.msk [vmem:[%s84] ss:$8 sm:$0xf] %vm83, %v82
    %s86 = scalar_lea.vmem [#allocation0], 3
    %87 = vst.msk [vmem:[%s86] ss:$8 sm:$0xf0] %vm83, %v82
    %s88 = scalar_lea.vmem [#allocation2], 16
    %v89 = vld.sshfl [vmem:[%s88] sm:$0xff pattern:$0xb3a29180]
    %90 = vrot.lane.b32.xlu0 %v89, 80
    %v91 = vpop.permute.xlu0 %90
    %vm92 = vcmask 130048
    %s93 = scalar_lea.vmem [#allocation0], 67
    %94 = vst.msk [vmem:[%s93] ss:$8 sm:$0xf] %vm92, %v91
    %s95 = scalar_lea.vmem [#allocation0], 67
    %96 = vst.msk [vmem:[%s95] ss:$8 sm:$0xf0] %vm92, %v91
    %v97 = vld.sshfl [vmem:[#allocation2] sm:$0xff pattern:$0xb3a29180]
    %98 = vrot.lane.b32.xlu0 %v97, 64
    %v99 = vpop.permute.xlu0 %98
    %vm100 = vcmask 130048
    %s101 = scalar_lea.vmem [#allocation0], 4
    %102 = vst.msk [vmem:[%s101] ss:$8 sm:$0xf] %vm100, %v99
    %s103 = scalar_lea.vmem [#allocation0], 4
    %104 = vst.msk [vmem:[%s103] ss:$8 sm:$0xf0] %vm100, %v99
    %s105 = scalar_lea.vmem [#allocation2], 16
    %v106 = vld.sshfl [vmem:[%s105] sm:$0xff pattern:$0xb3a29180]
    %107 = vrot.lane.b32.xlu0 %v106, 64
    %v108 = vpop.permute.xlu0 %107
    %vm109 = vcmask 130048
    %s110 = scalar_lea.vmem [#allocation0], 68
    %111 = vst.msk [vmem:[%s110] ss:$8 sm:$0xf] %vm109, %v108
    %s112 = scalar_lea.vmem [#allocation0], 68
    %113 = vst.msk [vmem:[%s112] ss:$8 sm:$0xf0] %vm109, %v108
    %v114 = vld.sshfl [vmem:[#allocation2] sm:$0xff pattern:$0xb3a29180]
    %115 = vrot.lane.b32.xlu0 %v114, 48
    %v116 = vpop.permute.xlu0 %115
    %vm117 = vcmask 130048
    %s118 = scalar_lea.vmem [#allocation0], 5
    %119 = vst.msk [vmem:[%s118] ss:$8 sm:$0xf] %vm117, %v116
    %s120 = scalar_lea.vmem [#allocation0], 5
    %121 = vst.msk [vmem:[%s120] ss:$8 sm:$0xf0] %vm117, %v116
    %s122 = scalar_lea.vmem [#allocation2], 16
    %v123 = vld.sshfl [vmem:[%s122] sm:$0xff pattern:$0xb3a29180]
    %124 = vrot.lane.b32.xlu0 %v123, 48
    %v125 = vpop.permute.xlu0 %124
    %vm126 = vcmask 130048
    %s127 = scalar_lea.vmem [#allocation0], 69
    %128 = vst.msk [vmem:[%s127] ss:$8 sm:$0xf] %vm126, %v125
    %s129 = scalar_lea.vmem [#allocation0], 69
    %130 = vst.msk [vmem:[%s129] ss:$8 sm:$0xf0] %vm126, %v125
    %v131 = vld.sshfl [vmem:[#allocation2] sm:$0xff pattern:$0xb3a29180]
    %132 = vrot.lane.b32.xlu0 %v131, 32
    %v133 = vpop.permute.xlu0 %132
    %vm134 = vcmask 130048
    %s135 = scalar_lea.vmem [#allocation0], 6
    %136 = vst.msk [vmem:[%s135] ss:$8 sm:$0xf] %vm134, %v133
    %s137 = scalar_lea.vmem [#allocation0], 6
    %138 = vst.msk [vmem:[%s137] ss:$8 sm:$0xf0] %vm134, %v133
    %s139 = scalar_lea.vmem [#allocation2], 16
    %v140 = vld.sshfl [vmem:[%s139] sm:$0xff pattern:$0xb3a29180]
    %141 = vrot.lane.b32.xlu0 %v140, 32
    %v142 = vpop.permute.xlu0 %141
    %vm143 = vcmask 130048
    %s144 = scalar_lea.vmem [#allocation0], 70
    %145 = vst.msk [vmem:[%s144] ss:$8 sm:$0xf] %vm143, %v142
    %s146 = scalar_lea.vmem [#allocation0], 70
    %147 = vst.msk [vmem:[%s146] ss:$8 sm:$0xf0] %vm143, %v142
    %v148 = vld.sshfl [vmem:[#allocation2] sm:$0xff pattern:$0xb3a29180]
    %149 = vrot.lane.b32.xlu0 %v148, 16
    %v150 = vpop.permute.xlu0 %149
    %vm151 = vcmask 130048
    %s152 = scalar_lea.vmem [#allocation0], 7
    %153 = vst.msk [vmem:[%s152] ss:$8 sm:$0xf] %vm151, %v150
    %s154 = scalar_lea.vmem [#allocation0], 7
    %155 = vst.msk [vmem:[%s154] ss:$8 sm:$0xf0] %vm151, %v150
    %s156 = scalar_lea.vmem [#allocation2], 16
    %v157 = vld.sshfl [vmem:[%s156] sm:$0xff pattern:$0xb3a29180]
    %158 = vrot.lane.b32.xlu0 %v157, 16
    %v159 = vpop.permute.xlu0 %158
    %vm160 = vcmask 130048
    %s161 = scalar_lea.vmem [#allocation0], 71
    %162 = vst.msk [vmem:[%s161] ss:$8 sm:$0xf] %vm160, %v159
    %s163 = scalar_lea.vmem [#allocation0], 71
    %164 = vst.msk [vmem:[%s163] ss:$8 sm:$0xf0] %vm160, %v159
    %s166 = ssub.s32 2048, 2048
    %167 = vsyncadd [#allocation1], %s166
    %s169 = sshll.u32 [#allocation0], 4
    %s170 = int_to_ptr.vmem [resolvable:$true] %s169
    %172 = dma.vmem_to_hbm [thread:$0]  %s170, 2048, %s1, [#allocation1]
    %173 = dma.done [#allocation1], 2048
    %174 = vsyncpa [#allocation1], 1

// kernel: _mean_teacher_step.1
$region0: #{_mean_teacher_step.1}
  #allocation0 [shape = 'u32[]', space=smem, size = 0x4, offset = 0x4, fixed_abs, tag = 'smem constant byte address 0x4 - core index']
  #allocation1 [shape = 'u32[144,128]{1,0:T(1,128)}', space=vmem, size = 0x12000, scoped, tag = 'internal scratch']
  %s0 = inlined_call_operand.vmem [shape: f32[2,4,256], index: 0, kind: input, shape index: {}]
  %s1 = inlined_call_operand.vmem [shape: f32[2,4,256], index: 1, kind: input, shape index: {}]
  %s2 = inlined_call_operand.vmem [shape: f32[2,4,256], index: 2, kind: input, shape index: {}]
  %s3 = inlined_call_operand.vmem [shape: f32[2,32,4], index: 3, kind: input, shape index: {}]
  %s4 = inlined_call_operand.vmem [shape: f32[2,32,4], index: 4, kind: input, shape index: {}]
  %s5 = inlined_call_operand.vmem [shape: f32[2,32,1], index: 5, kind: input, shape index: {}]
  %s6 = inlined_call_operand.vmem [shape: f32[2,8,32], index: 6, kind: input, shape index: {}]
  %s7 = inlined_call_operand.vmem [shape: f32[2,8,1], index: 7, kind: input, shape index: {}]
  %s8 = inlined_call_operand.vmem [shape: f32[2,2,8,256], index: 8, kind: output, shape index: {0}]
  %s9 = inlined_call_operand.vmem [shape: f32[2,2,32,256], index: 9, kind: output, shape index: {1}]
  %10 = xla_tuple %s8, %s9
  %s11 = sld [smem:[#allocation0]]
  $region73: #{_mean_teacher_step.1} parent=0
    _
  %s13 = ssub.s32 1, %s11
  %s14 = scalar_select 0, %s13, %s11
  loop: start=0, step=1, limit=6
  $region2: #{_mean_teacher_step.1} parent=0 // loop_pre_header
    _
  $region3: #{_mean_teacher_step.1} parent=0 // loop_header
    %s16 = sphi 0, %s20
    %p17 = scmp.ge.s32.totalorder %s16, 6
    %s23 = sphi 0, %s42
    %s24 = sphi 0, %s38
    %s25 = sphi 0, %s34
    %s26 = sphi 0, %s23
    %s27 = sphi 0, %s24
    %s28 = sphi 0, %s25
    %s29 = sphi 0, %s26
    %s30 = sphi 0, %s27
    %s31 = sphi 0, %s28
    %s47 = sphi 0, %s49
    %s50 = sphi 0, %s47
    %s51 = sphi 0, %s50
    %s67 = sphi 0, %s51
    %s75 = sphi 0, %s77
    %s78 = sphi 0, %s75
    %s79 = sphi 0, %s78
    %s95 = sphi 0, %s79
    %s103 = sphi 0, %s105
    %s106 = sphi 0, %s103
    %s107 = sphi 0, %s106
    %s123 = sphi 0, %s107
    %s129 = sphi 0, %s131
    %s132 = sphi 0, %s129
    %s133 = sphi 0, %s132
    %s149 = sphi 0, %s133
    %s155 = sphi 0, %s157
    %s158 = sphi 0, %s155
    %s159 = sphi 0, %s158
    %s175 = sphi 0, %s159
    %s181 = sphi 0, %s183
    %s184 = sphi 0, %s181
    %s185 = sphi 0, %s184
    %s201 = sphi 0, %s185
    %s207 = sphi 0, %s209
    %s210 = sphi 0, %s207
    %s211 = sphi 0, %s210
    %s227 = sphi 0, %s211
    %s233 = sphi 0, %s235
    %s236 = sphi 0, %s233
    %s237 = sphi 0, %s236
    %s253 = sphi 0, %s237
    %s263 = sphi 0, %s265
    %s266 = sphi 0, %s263
    %s267 = sphi 0, %s266
    %s283 = sphi 0, %s267
    %s293 = sphi 0, %s295
    %s296 = sphi 0, %s293
    %s297 = sphi 0, %s296
    %s313 = sphi 0, %s297
  $region4: #{_mean_teacher_step.1} parent=0 // loop_header_branch
    %19 = sbr.rel (%p17) target = $region8
  $region5: #{_mean_teacher_step.1} parent=0 // loop_body
    %s21 = ssub.s32 %s16, 1
    %s22 = ssub.s32 %s16, 2
    %s32 = sadd.s32 1, %s25
    %p33 = scmp.ge.s32.totalorder %s32, 2
    %s34 = scalar_select %p33, 0, %s32
    %s35 = sadd.s32 1, %s24
    %s36 = scalar_select %p33, %s35, %s24
    %p37 = scmp.ge.s32.totalorder %s36, 1
    %s38 = scalar_select %p37, 0, %s36
    %s39 = sadd.s32 1, %s23
    %s40 = scalar_select %p37, %s39, %s23
    %p41 = scmp.ge.s32.totalorder %s40, 2
    %s42 = scalar_select %p41, 0, %s40
    %s43 = ssub.s32 %s23, %s42
    %s44 = ssub.s32 %s24, %s38
    %s45 = sor.u32 %s43, %s44
    %p46 = scmp.eq.s32.totalorder %s45, 0
    %s48 = sadd.s32 %s47, 1
    %s49 = scalar_select %p46, %s47, %s48
    %p52 = pneg %p46
    %p53 = scmp.eq.s32.totalorder %s16, 3
    %p54 = por %p52, %p53
    %p55 = scmp.ne.s32.totalorder %s47, %s50
    %p56 = scmp.eq.s32.totalorder %s16, 0
    %p57 = por %p55, %p56
    %p58 = scmp.ne.s32.totalorder %s47, %s50
    %p59 = scmp.eq.s32.totalorder %s21, 3
    %p60 = por %p58, %p59
    %p61 = scmp.ne.s32.totalorder %s50, %s51
    %p62 = scmp.eq.s32.totalorder %s21, 0
    %p63 = por %p61, %p62
    %p64 = scmp.ne.s32.totalorder %s50, %s51
    %p65 = scmp.eq.s32.totalorder %s22, 3
    %p66 = por %p64, %p65
    %p68 = scmp.ne.s32.totalorder %s51, %s67
    %p69 = scmp.eq.s32.totalorder %s22, 0
    %p70 = por %p68, %p69
    %s71 = ssub.s32 %s23, %s42
    %s72 = ssub.s32 %s24, %s38
    %s73 = sor.u32 %s71, %s72
    %p74 = scmp.eq.s32.totalorder %s73, 0
    %s76 = sadd.s32 %s75, 1
    %s77 = scalar_select %p74, %s75, %s76
    %p80 = pneg %p74
    %p81 = scmp.eq.s32.totalorder %s16, 3
    %p82 = por %p80, %p81
    %p83 = scmp.ne.s32.totalorder %s75, %s78
    %p84 = scmp.eq.s32.totalorder %s16, 0
    %p85 = por %p83, %p84
    %p86 = scmp.ne.s32.totalorder %s75, %s78
    %p87 = scmp.eq.s32.totalorder %s21, 3
    %p88 = por %p86, %p87
    %p89 = scmp.ne.s32.totalorder %s78, %s79
    %p90 = scmp.eq.s32.totalorder %s21, 0
    %p91 = por %p89, %p90
    %p92 = scmp.ne.s32.totalorder %s78, %s79
    %p93 = scmp.eq.s32.totalorder %s22, 3
    %p94 = por %p92, %p93
    %p96 = scmp.ne.s32.totalorder %s79, %s95
    %p97 = scmp.eq.s32.totalorder %s22, 0
    %p98 = por %p96, %p97
    %s99 = ssub.s32 %s23, %s42
    %s100 = ssub.s32 %s24, %s38
    %s101 = sor.u32 %s99, %s100
    %p102 = scmp.eq.s32.totalorder %s101, 0
    %s104 = sadd.s32 %s103, 1
    %s105 = scalar_select %p102, %s103, %s104
    %p108 = pneg %p102
    %p109 = scmp.eq.s32.totalorder %s16, 3
    %p110 = por %p108, %p109
    %p111 = scmp.ne.s32.totalorder %s103, %s106
    %p112 = scmp.eq.s32.totalorder %s16, 0
    %p113 = por %p111, %p112
    %p114 = scmp.ne.s32.totalorder %s103, %s106
    %p115 = scmp.eq.s32.totalorder %s21, 3
    %p116 = por %p114, %p115
    %p117 = scmp.ne.s32.totalorder %s106, %s107
    %p118 = scmp.eq.s32.totalorder %s21, 0
    %p119 = por %p117, %p118
    %p120 = scmp.ne.s32.totalorder %s106, %s107
    %p121 = scmp.eq.s32.totalorder %s22, 3
    %p122 = por %p120, %p121
    %p124 = scmp.ne.s32.totalorder %s107, %s123
    %p125 = scmp.eq.s32.totalorder %s22, 0
    %p126 = por %p124, %p125
    %s127 = ssub.s32 %s25, %s34
    %p128 = scmp.eq.s32.totalorder %s127, 0
    %s130 = sadd.s32 %s129, 1
    %s131 = scalar_select %p128, %s129, %s130
    %p134 = pneg %p128
    %p135 = scmp.eq.s32.totalorder %s16, 3
    %p136 = por %p134, %p135
    %p137 = scmp.ne.s32.totalorder %s129, %s132
    %p138 = scmp.eq.s32.totalorder %s16, 0
    %p139 = por %p137, %p138
    %p140 = scmp.ne.s32.totalorder %s129, %s132
    %p141 = scmp.eq.s32.totalorder %s21, 3
    %p142 = por %p140, %p141
    %p143 = scmp.ne.s32.totalorder %s132, %s133
    %p144 = scmp.eq.s32.totalorder %s21, 0
    %p145 = por %p143, %p144
    %p146 = scmp.ne.s32.totalorder %s132, %s133
    %p147 = scmp.eq.s32.totalorder %s22, 3
    %p148 = por %p146, %p147
    %p150 = scmp.ne.s32.totalorder %s133, %s149
    %p151 = scmp.eq.s32.totalorder %s22, 0
    %p152 = por %p150, %p151
    %s153 = ssub.s32 %s25, %s34
    %p154 = scmp.eq.s32.totalorder %s153, 0
    %s156 = sadd.s32 %s155, 1
    %s157 = scalar_select %p154, %s155, %s156
    %p160 = pneg %p154
    %p161 = scmp.eq.s32.totalorder %s16, 3
    %p162 = por %p160, %p161
    %p163 = scmp.ne.s32.totalorder %s155, %s158
    %p164 = scmp.eq.s32.totalorder %s16, 0
    %p165 = por %p163, %p164
    %p166 = scmp.ne.s32.totalorder %s155, %s158
    %p167 = scmp.eq.s32.totalorder %s21, 3
    %p168 = por %p166, %p167
    %p169 = scmp.ne.s32.totalorder %s158, %s159
    %p170 = scmp.eq.s32.totalorder %s21, 0
    %p171 = por %p169, %p170
    %p172 = scmp.ne.s32.totalorder %s158, %s159
    %p173 = scmp.eq.s32.totalorder %s22, 3
    %p174 = por %p172, %p173
    %p176 = scmp.ne.s32.totalorder %s159, %s175
    %p177 = scmp.eq.s32.totalorder %s22, 0
    %p178 = por %p176, %p177
    %s179 = ssub.s32 %s25, %s34
    %p180 = scmp.eq.s32.totalorder %s179, 0
    %s182 = sadd.s32 %s181, 1
    %s183 = scalar_select %p180, %s181, %s182
    %p186 = pneg %p180
    %p187 = scmp.eq.s32.totalorder %s16, 3
    %p188 = por %p186, %p187
    %p189 = scmp.ne.s32.totalorder %s181, %s184
    %p190 = scmp.eq.s32.totalorder %s16, 0
    %p191 = por %p189, %p190
    %p192 = scmp.ne.s32.totalorder %s181, %s184
    %p193 = scmp.eq.s32.totalorder %s21, 3
    %p194 = por %p192, %p193
    %p195 = scmp.ne.s32.totalorder %s184, %s185
    %p196 = scmp.eq.s32.totalorder %s21, 0
    %p197 = por %p195, %p196
    %p198 = scmp.ne.s32.totalorder %s184, %s185
    %p199 = scmp.eq.s32.totalorder %s22, 3
    %p200 = por %p198, %p199
    %p202 = scmp.ne.s32.totalorder %s185, %s201
    %p203 = scmp.eq.s32.totalorder %s22, 0
    %p204 = por %p202, %p203
    %s205 = ssub.s32 %s25, %s34
    %p206 = scmp.eq.s32.totalorder %s205, 0
    %s208 = sadd.s32 %s207, 1
    %s209 = scalar_select %p206, %s207, %s208
    %p212 = pneg %p206
    %p213 = scmp.eq.s32.totalorder %s16, 3
    %p214 = por %p212, %p213
    %p215 = scmp.ne.s32.totalorder %s207, %s210
    %p216 = scmp.eq.s32.totalorder %s16, 0
    %p217 = por %p215, %p216
    %p218 = scmp.ne.s32.totalorder %s207, %s210
    %p219 = scmp.eq.s32.totalorder %s21, 3
    %p220 = por %p218, %p219
    %p221 = scmp.ne.s32.totalorder %s210, %s211
    %p222 = scmp.eq.s32.totalorder %s21, 0
    %p223 = por %p221, %p222
    %p224 = scmp.ne.s32.totalorder %s210, %s211
    %p225 = scmp.eq.s32.totalorder %s22, 3
    %p226 = por %p224, %p225
    %p228 = scmp.ne.s32.totalorder %s211, %s227
    %p229 = scmp.eq.s32.totalorder %s22, 0
    %p230 = por %p228, %p229
    %s231 = ssub.s32 %s25, %s34
    %p232 = scmp.eq.s32.totalorder %s231, 0
    %s234 = sadd.s32 %s233, 1
    %s235 = scalar_select %p232, %s233, %s234
    %p238 = pneg %p232
    %p239 = scmp.eq.s32.totalorder %s16, 3
    %p240 = por %p238, %p239
    %p241 = scmp.ne.s32.totalorder %s233, %s236
    %p242 = scmp.eq.s32.totalorder %s16, 0
    %p243 = por %p241, %p242
    %p244 = scmp.ne.s32.totalorder %s233, %s236
    %p245 = scmp.eq.s32.totalorder %s21, 3
    %p246 = por %p244, %p245
    %p247 = scmp.ne.s32.totalorder %s236, %s237
    %p248 = scmp.eq.s32.totalorder %s21, 0
    %p249 = por %p247, %p248
    %p250 = scmp.ne.s32.totalorder %s236, %s237
    %p251 = scmp.eq.s32.totalorder %s22, 3
    %p252 = por %p250, %p251
    %p254 = scmp.ne.s32.totalorder %s237, %s253
    %p255 = scmp.eq.s32.totalorder %s22, 0
    %p256 = por %p254, %p255
    %s257 = ssub.s32 %s25, %s34
    %s258 = ssub.s32 %s23, %s42
    %s259 = sor.u32 %s257, %s258
    %s260 = ssub.s32 %s24, %s38
    %s261 = sor.u32 %s259, %s260
    %p262 = scmp.eq.s32.totalorder %s261, 0
    %s264 = sadd.s32 %s263, 1
    %s265 = scalar_select %p262, %s263, %s264
    %p268 = pneg %p262
    %p269 = scmp.eq.s32.totalorder %s16, 3
    %p270 = por %p268, %p269
    %p271 = scmp.ne.s32.totalorder %s263, %s266
    %p272 = scmp.eq.s32.totalorder %s16, 0
    %p273 = por %p271, %p272
    %p274 = scmp.ne.s32.totalorder %s263, %s266
    %p275 = scmp.eq.s32.totalorder %s21, 3
    %p276 = por %p274, %p275
    %p277 = scmp.ne.s32.totalorder %s266, %s267
    %p278 = scmp.eq.s32.totalorder %s21, 0
    %p279 = por %p277, %p278
    %p280 = scmp.ne.s32.totalorder %s266, %s267
    %p281 = scmp.eq.s32.totalorder %s22, 3
    %p282 = por %p280, %p281
    %p284 = scmp.ne.s32.totalorder %s267, %s283
    %p285 = scmp.eq.s32.totalorder %s22, 0
    %p286 = por %p284, %p285
    %s287 = ssub.s32 %s25, %s34
    %s288 = ssub.s32 %s23, %s42
    %s289 = sor.u32 %s287, %s288
    %s290 = ssub.s32 %s24, %s38
    %s291 = sor.u32 %s289, %s290
    %p292 = scmp.eq.s32.totalorder %s291, 0
    %s294 = sadd.s32 %s293, 1
    %s295 = scalar_select %p292, %s293, %s294
    %p298 = pneg %p292
    %p299 = scmp.eq.s32.totalorder %s16, 3
    %p300 = por %p298, %p299
    %p301 = scmp.ne.s32.totalorder %s293, %s296
    %p302 = scmp.eq.s32.totalorder %s16, 0
    %p303 = por %p301, %p302
    %p304 = scmp.ne.s32.totalorder %s293, %s296
    %p305 = scmp.eq.s32.totalorder %s21, 3
    %p306 = por %p304, %p305
    %p307 = scmp.ne.s32.totalorder %s296, %s297
    %p308 = scmp.eq.s32.totalorder %s21, 0
    %p309 = por %p307, %p308
    %p310 = scmp.ne.s32.totalorder %s296, %s297
    %p311 = scmp.eq.s32.totalorder %s22, 3
    %p312 = por %p310, %p311
    %p314 = scmp.ne.s32.totalorder %s297, %s313
    %p315 = scmp.eq.s32.totalorder %s22, 0
    %p316 = por %p314, %p315
    %p317 = scmp.le.s32.totalorder 1, %s16
    %p318 = scmp.lt.s32.totalorder %s16, 5
    %p319 = pnand %p317, %p318
    %p320 = pneg %p319
    // Predicated region
    $region9: #{_mean_teacher_step.1} parent=5 // pred_check
      _
    $region10: #{_mean_teacher_step.1} parent=5 // pred_check_branch
      %322 = sbr.rel (%p319) target = $region12
    $region11: #{_mean_teacher_step.1} parent=5 // pred_region
      %s323 = ssub.s32 %s16, 1
    $region12: #{_mean_teacher_step.1} parent=5 // pred_fallthru
      _
    %p324 = scmp.lt.s32.totalorder %s16, 4
    // Predicated region
    $region13: #{_mean_teacher_step.1} parent=5 // pred_check
      %p325 = pneg %p324
    $region14: #{_mean_teacher_step.1} parent=5 // pred_check_branch
      %327 = sbr.rel (%p325) target = $region16
    $region15: #{_mean_teacher_step.1} parent=5 // pred_region
      // Predicated region
      $region17: #{_mean_teacher_step.1} parent=15 // pred_check
        %p328 = pneg %p57
      $region18: #{_mean_teacher_step.1} parent=15 // pred_check_branch
        %330 = sbr.rel (%p328) target = $region20
      $region19: #{_mean_teacher_step.1} parent=15 // pred_region
        %s331 = smul.u32 2, %s24
        %p332 = scmp.lt.s32.totalorder %s23, 1
        %s333 = scalar_select %p332, %s23, 1
        %p334 = scmp.lt.s32.totalorder %s331, 1
        %s335 = scalar_select %p334, %s331, 1
        %s336 = smul.addr %s333, 2
        %s337 = sadd.s32 %s335, %s336
        %s338 = smul.addr %s337, 4
        %s339 = scalar_lea.vmem %s0, %s338
        %s340 = smul.u32 2, %s24
      $region20: #{_mean_teacher_step.1} parent=15 // pred_fallthru
        _
      // Predicated region
      $region21: #{_mean_teacher_step.1} parent=15 // pred_check
        %p341 = pneg %p85
      $region22: #{_mean_teacher_step.1} parent=15 // pred_check_branch
        %343 = sbr.rel (%p341) target = $region24
      $region23: #{_mean_teacher_step.1} parent=15 // pred_region
        %s344 = smul.u32 2, %s24
        %p345 = scmp.lt.s32.totalorder %s23, 1
        %s346 = scalar_select %p345, %s23, 1
        %p347 = scmp.lt.s32.totalorder %s344, 1
        %s348 = scalar_select %p347, %s344, 1
        %s349 = smul.addr %s346, 2
        %s350 = sadd.s32 %s348, %s349
        %s351 = smul.addr %s350, 4
        %s352 = scalar_lea.vmem %s1, %s351
        %s353 = smul.u32 2, %s24
      $region24: #{_mean_teacher_step.1} parent=15 // pred_fallthru
        _
      // Predicated region
      $region25: #{_mean_teacher_step.1} parent=15 // pred_check
        %p354 = pneg %p113
      $region26: #{_mean_teacher_step.1} parent=15 // pred_check_branch
        %356 = sbr.rel (%p354) target = $region28
      $region27: #{_mean_teacher_step.1} parent=15 // pred_region
        %s357 = smul.u32 2, %s24
        %p358 = scmp.lt.s32.totalorder %s23, 1
        %s359 = scalar_select %p358, %s23, 1
        %p360 = scmp.lt.s32.totalorder %s357, 1
        %s361 = scalar_select %p360, %s357, 1
        %s362 = smul.addr %s359, 2
        %s363 = sadd.s32 %s361, %s362
        %s364 = smul.addr %s363, 4
        %s365 = scalar_lea.vmem %s2, %s364
        %s366 = smul.u32 2, %s24
      $region28: #{_mean_teacher_step.1} parent=15 // pred_fallthru
        _
      // Predicated region
      $region29: #{_mean_teacher_step.1} parent=15 // pred_check
        %p367 = pneg %p139
      $region30: #{_mean_teacher_step.1} parent=15 // pred_check_branch
        %369 = sbr.rel (%p367) target = $region32
      $region31: #{_mean_teacher_step.1} parent=15 // pred_region
        %p370 = scmp.lt.s32.totalorder %s25, 1
        %s371 = scalar_select %p370, %s25, 1
        %s372 = smul.addr %s371, 4
        %s373 = smul.addr %s372, 8
        %s374 = scalar_lea.vmem %s3, %s373
      $region32: #{_mean_teacher_step.1} parent=15 // pred_fallthru
        _
      // Predicated region
      $region33: #{_mean_teacher_step.1} parent=15 // pred_check
        %p375 = pneg %p165
      $region34: #{_mean_teacher_step.1} parent=15 // pred_check_branch
        %377 = sbr.rel (%p375) target = $region36
      $region35: #{_mean_teacher_step.1} parent=15 // pred_region
        %p378 = scmp.lt.s32.totalorder %s25, 1
        %s379 = scalar_select %p378, %s25, 1
        %s380 = smul.addr %s379, 4
        %s381 = smul.addr %s380, 8
        %s382 = scalar_lea.vmem %s4, %s381
      $region36: #{_mean_teacher_step.1} parent=15 // pred_fallthru
        _
      // Predicated region
      $region37: #{_mean_teacher_step.1} parent=15 // pred_check
        %p383 = pneg %p191
      $region38: #{_mean_teacher_step.1} parent=15 // pred_check_branch
        %385 = sbr.rel (%p383) target = $region40
      $region39: #{_mean_teacher_step.1} parent=15 // pred_region
        %p386 = scmp.lt.s32.totalorder %s25, 1
        %s387 = scalar_select %p386, %s25, 1
        %s388 = smul.addr %s387, 4
        %s389 = smul.addr %s388, 8
        %s390 = scalar_lea.vmem %s5, %s389
      $region40: #{_mean_teacher_step.1} parent=15 // pred_fallthru
        _
      // Predicated region
      $region41: #{_mean_teacher_step.1} parent=15 // pred_check
        %p391 = pneg %p217
      $region42: #{_mean_teacher_step.1} parent=15 // pred_check_branch
        %393 = sbr.rel (%p391) target = $region44
      $region43: #{_mean_teacher_step.1} parent=15 // pred_region
        %p394 = scmp.lt.s32.totalorder %s25, 1
        %s395 = scalar_select %p394, %s25, 1
        %s396 = smul.addr %s395, 8
        %s397 = scalar_lea.vmem %s6, %s396
      $region44: #{_mean_teacher_step.1} parent=15 // pred_fallthru
        _
      // Predicated region
      $region45: #{_mean_teacher_step.1} parent=15 // pred_check
        %p398 = pneg %p243
      $region46: #{_mean_teacher_step.1} parent=15 // pred_check_branch
        %400 = sbr.rel (%p398) target = $region48
      $region47: #{_mean_teacher_step.1} parent=15 // pred_region
        %p401 = scmp.lt.s32.totalorder %s25, 1
        %s402 = scalar_select %p401, %s25, 1
        %s403 = smul.addr %s402, 8
        %s404 = scalar_lea.vmem %s7, %s403
      $region48: #{_mean_teacher_step.1} parent=15 // pred_fallthru
        _
    $region16: #{_mean_teacher_step.1} parent=5 // pred_fallthru
      _
    %p405 = scmp.le.s32.totalorder 1, %s16
    %p406 = scmp.lt.s32.totalorder %s16, 5
    %p407 = pnand %p405, %p406
    %p408 = pneg %p407
    // Predicated region
    $region49: #{_mean_teacher_step.1} parent=5 // pred_check
      _
    $region50: #{_mean_teacher_step.1} parent=5 // pred_check_branch
      %410 = sbr.rel (%p407) target = $region52
    $region51: #{_mean_teacher_step.1} parent=5 // pred_region
      %s411 = ssub.s32 %s16, 1
      %s412 = smul.u32 2, %s27
      %p413 = scmp.lt.s32.totalorder %s26, 1
      %s414 = scalar_select %p413, %s26, 1
      %p415 = scmp.lt.s32.totalorder %s412, 1
      %s416 = scalar_select %p415, %s412, 1
      %s417 = smul.addr %s414, 2
      %s418 = sadd.s32 %s416, %s417
      %s419 = smul.addr %s418, 4
      %s420 = scalar_lea.vmem %s0, %s419
      %p421 = pneg %p63
      %p422 = pneg %p60
      %s423 = smul.u32 2, %s27
      %p424 = scmp.lt.s32.totalorder %s26, 1
      %s425 = scalar_select %p424, %s26, 1
      %p426 = scmp.lt.s32.totalorder %s423, 1
      %s427 = scalar_select %p426, %s423, 1
      %s428 = smul.addr %s425, 2
      %s429 = sadd.s32 %s427, %s428
      %s430 = smul.addr %s429, 4
      %s431 = scalar_lea.vmem %s1, %s430
      %p432 = pneg %p91
      %p433 = pneg %p88
      %s434 = smul.u32 2, %s27
      %p435 = scmp.lt.s32.totalorder %s26, 1
      %s436 = scalar_select %p435, %s26, 1
      %p437 = scmp.lt.s32.totalorder %s434, 1
      %s438 = scalar_select %p437, %s434, 1
      %s439 = smul.addr %s436, 2
      %s440 = sadd.s32 %s438, %s439
      %s441 = smul.addr %s440, 4
      %s442 = scalar_lea.vmem %s2, %s441
      %p443 = pneg %p119
      %p444 = pneg %p116
      %p445 = scmp.lt.s32.totalorder %s28, 1
      %s446 = scalar_select %p445, %s28, 1
      %s447 = smul.addr %s446, 4
      %s448 = smul.addr %s447, 8
      %s449 = scalar_lea.vmem %s3, %s448
      %p450 = pneg %p145
      %p451 = pneg %p142
      %p452 = scmp.lt.s32.totalorder %s28, 1
      %s453 = scalar_select %p452, %s28, 1
      %s454 = smul.addr %s453, 4
      %s455 = smul.addr %s454, 8
      %s456 = scalar_lea.vmem %s4, %s455
      %p457 = pneg %p171
      %p458 = pneg %p168
      %p459 = scmp.lt.s32.totalorder %s28, 1
      %s460 = scalar_select %p459, %s28, 1
      %s461 = smul.addr %s460, 4
      %s462 = smul.addr %s461, 8
      %s463 = scalar_lea.vmem %s5, %s462
      %p464 = pneg %p197
      %p465 = pneg %p194
      %p466 = scmp.lt.s32.totalorder %s28, 1
      %s467 = scalar_select %p466, %s28, 1
      %s468 = smul.addr %s467, 8
      %s469 = scalar_lea.vmem %s6, %s468
      %p470 = pneg %p223
      %p471 = pneg %p220
      %p472 = scmp.lt.s32.totalorder %s28, 1
      %s473 = scalar_select %p472, %s28, 1
      %s474 = smul.addr %s473, 8
      %s475 = scalar_lea.vmem %s7, %s474
      %p476 = pneg %p249
      %p477 = pneg %p246
      %p478 = pneg %p279
      %p479 = pneg %p276
      %s480 = smul.u32 2, %s27
      %p481 = scmp.lt.s32.totalorder %s28, 1
      %s482 = scalar_select %p481, %s28, 1
      %p483 = scmp.lt.s32.totalorder %s26, 1
      %s484 = scalar_select %p483, %s26, 1
      %p485 = scmp.lt.s32.totalorder %s480, 1
      %s486 = scalar_select %p485, %s480, 1
      %s487 = smul.addr %s484, 2
      %s488 = sadd.s32 %s486, %s487
      %s489 = smul.addr %s482, 4
      %s490 = sadd.s32 %s488, %s489
      %s491 = smul.addr %s490, 8
      %s492 = scalar_lea.vmem %s8, %s491
      %p493 = pneg %p309
      %p494 = pneg %p306
      %s495 = smul.u32 2, %s27
      %p496 = scmp.lt.s32.totalorder %s28, 1
      %s497 = scalar_select %p496, %s28, 1
      %p498 = scmp.lt.s32.totalorder %s26, 1
      %s499 = scalar_select %p498, %s26, 1
      %p500 = scmp.lt.s32.totalorder %s495, 1
      %s501 = scalar_select %p500, %s495, 1
      %s502 = smul.addr %s499, 8
      %s503 = sadd.s32 %s501, %s502
      %s504 = smul.addr %s497, 16
      %s505 = sadd.s32 %s503, %s504
      %s506 = smul.addr %s505, 8
      %s507 = scalar_lea.vmem %s9, %s506
      %s508 = smul.u32 2, %s27
      %p509 = scmp.lt.s32.totalorder %s26, 1
      %s510 = scalar_select %p509, %s26, 1
      %p511 = scmp.lt.s32.totalorder %s508, 1
      %s512 = scalar_select %p511, %s508, 1
      %s513 = smul.addr %s510, 2
      %s514 = sadd.s32 %s512, %s513
      %s515 = smul.addr %s514, 4
      %s516 = scalar_lea.vmem %s0, %s515
      %s517 = smul.u32 2, %s27
      %s518 = smul.u32 2, %s27
      %p519 = scmp.lt.s32.totalorder %s26, 1
      %s520 = scalar_select %p519, %s26, 1
      %p521 = scmp.lt.s32.totalorder %s518, 1
      %s522 = scalar_select %p521, %s518, 1
      %s523 = smul.addr %s520, 2
      %s524 = sadd.s32 %s522, %s523
      %s525 = smul.addr %s524, 4
      %s526 = scalar_lea.vmem %s1, %s525
      %s527 = smul.u32 2, %s27
      %s528 = smul.u32 2, %s27
      %p529 = scmp.lt.s32.totalorder %s26, 1
      %s530 = scalar_select %p529, %s26, 1
      %p531 = scmp.lt.s32.totalorder %s528, 1
      %s532 = scalar_select %p531, %s528, 1
      %s533 = smul.addr %s530, 2
      %s534 = sadd.s32 %s532, %s533
      %s535 = smul.addr %s534, 4
      %s536 = scalar_lea.vmem %s2, %s535
      %s537 = smul.u32 2, %s27
      %p538 = scmp.lt.s32.totalorder %s28, 1
      %s539 = scalar_select %p538, %s28, 1
      %s540 = smul.addr %s539, 4
      %s541 = smul.addr %s540, 8
      %s542 = scalar_lea.vmem %s3, %s541
      %p543 = scmp.lt.s32.totalorder %s28, 1
      %s544 = scalar_select %p543, %s28, 1
      %s545 = smul.addr %s544, 4
      %s546 = smul.addr %s545, 8
      %s547 = scalar_lea.vmem %s4, %s546
      %p548 = scmp.lt.s32.totalorder %s28, 1
      %s549 = scalar_select %p548, %s28, 1
      %s550 = smul.addr %s549, 4
      %s551 = smul.addr %s550, 8
      %s552 = scalar_lea.vmem %s5, %s551
      %p553 = scmp.lt.s32.totalorder %s28, 1
      %s554 = scalar_select %p553, %s28, 1
      %s555 = smul.addr %s554, 8
      %s556 = scalar_lea.vmem %s6, %s555
      %p557 = scmp.lt.s32.totalorder %s28, 1
      %s558 = scalar_select %p557, %s28, 1
      %s559 = smul.addr %s558, 8
      %s560 = scalar_lea.vmem %s7, %s559
      %s561 = smul.u32 2, %s27
      %p562 = scmp.lt.s32.totalorder %s28, 1
      %s563 = scalar_select %p562, %s28, 1
      %p564 = scmp.lt.s32.totalorder %s26, 1
      %s565 = scalar_select %p564, %s26, 1
      %p566 = scmp.lt.s32.totalorder %s561, 1
      %s567 = scalar_select %p566, %s561, 1
      %s568 = smul.addr %s565, 2
      %s569 = sadd.s32 %s567, %s568
      %s570 = smul.addr %s563, 4
      %s571 = sadd.s32 %s569, %s570
      %s572 = smul.addr %s571, 8
      %s573 = scalar_lea.vmem %s8, %s572
      %s574 = smul.u32 2, %s27
      %s575 = smul.u32 2, %s27
      %p576 = scmp.lt.s32.totalorder %s28, 1
      %s577 = scalar_select %p576, %s28, 1
      %p578 = scmp.lt.s32.totalorder %s26, 1
      %s579 = scalar_select %p578, %s26, 1
      %p580 = scmp.lt.s32.totalorder %s575, 1
      %s581 = scalar_select %p580, %s575, 1
      %s582 = smul.addr %s579, 8
      %s583 = sadd.s32 %s581, %s582
      %s584 = smul.addr %s577, 16
      %s585 = sadd.s32 %s583, %s584
      %s586 = smul.addr %s585, 8
      %s587 = scalar_lea.vmem %s9, %s586
      %s588 = smul.u32 2, %s27
      %p589 = scmp.eq.s32.totalorder %s28, 1
      %v590 = vld [vmem:[%s526] sm:$0xff]
      %v591 = vld [vmem:[%s516] sm:$0xff]
      %s592 = scalar_select %p589, 1, 0
      %v593 = vstv %s592
      %vm594 = vcmp.eq.s32.totalorder %v593, 1
      %v595 = vsel %vm594, %v590, %v591
      %v596 = vld [vmem:[%s542] sm:$0xff]
      %v597 = vld [vmem:[%s542 + $0x8] sm:$0xff]
      %v598 = vld [vmem:[%s542 + $0x10] sm:$0xff]
      %v599 = vld [vmem:[%s542 + $0x18] sm:$0xff]
      %v600 = vld [vmem:[%s547] sm:$0xff]
      %v601 = vld [vmem:[%s547 + $0x8] sm:$0xff]
      %v602 = vld [vmem:[%s547 + $0x10] sm:$0xff]
      %v603 = vld [vmem:[%s547 + $0x18] sm:$0xff]
      %v604 = vld [vmem:[%s536] sm:$0xff]
      %v606 = vcombine.high %v604, %v604
      %vm607 = vcmask 31744
      %v609 = vsel %vm607, %v600, 0
      %v612 = vsel %vm607, %v601, 0
      %v615 = vsel %vm607, %v602, 0
      %v618 = vsel %vm607, %v603, 0
      %vm620 = vcmask 1043456
      %v621 = vsel %vm620, %v604, 0
      %v623 = vsel %vm620, %v606, 0
      %625 = vmatprep.subr.mxu0 %v623
      %626 = vmatpush1.msra.mxu0 %v621
      %627 = vmatprep.subr.mxu0 0.0
      %628 = vmatpush1.msra.mxu0 0.0
      %629 = vmatprep.subr.mxu0 0.0
      %630 = vmatpush1.msra.mxu0 0.0
      %631 = vmatprep.subr.mxu0 0.0
      %632 = vmatpush1.msra.mxu0 0.0
      %633 = vmatprep.subr.mxu0 0.0
      %634 = vmatpush1.msra.mxu0 0.0
      %635 = vmatprep.subr.mxu0 0.0
      %636 = vmatpush1.msra.mxu0 0.0
      %637 = vmatprep.subr.mxu0 0.0
      %638 = vmatpush1.msra.mxu0 0.0
      %639 = vmatprep.subr.mxu0 0.0
      %640 = vmatpush1.msra.mxu0 0.0
      %641 = vmatprep.subr.mxu0 0.0
      %642 = vmatpush1.msra.mxu0 0.0
      %643 = vmatprep.subr.mxu0 0.0
      %644 = vmatpush1.msra.mxu0 0.0
      %645 = vmatprep.subr.mxu0 0.0
      %646 = vmatpush1.msra.mxu0 0.0
      %647 = vmatprep.subr.mxu0 0.0
      %648 = vmatpush1.msra.mxu0 0.0
      %649 = vmatprep.subr.mxu0 0.0
      %650 = vmatpush1.msra.mxu0 0.0
      %651 = vmatprep.subr.mxu0 0.0
      %652 = vmatpush1.msra.mxu0 0.0
      %653 = vmatprep.subr.mxu0 0.0
      %654 = vmatpush1.msra.mxu0 0.0
      %655 = vmatprep.subr.mxu0 0.0
      %656 = vmatpush1.msra.mxu0 0.0
      %657 = vmatprep.subr.mxu0 0.0
      %658 = vmatpush1.msra.mxu0 0.0
      %659 = vmatprep.subr.mxu0 0.0
      %660 = vmatpush1.msra.mxu0 0.0
      %661 = vmatprep.subr.mxu0 0.0
      %662 = vmatpush1.msra.mxu0 0.0
      %663 = vmatprep.subr.mxu0 0.0
      %664 = vmatpush1.msra.mxu0 0.0
      %665 = vmatprep.subr.mxu0 0.0
      %666 = vmatpush1.msra.mxu0 0.0
      %667 = vmatprep.subr.mxu0 0.0
      %668 = vmatpush1.msra.mxu0 0.0
      %669 = vmatprep.subr.mxu0 0.0
      %670 = vmatpush1.msra.mxu0 0.0
      %671 = vmatprep.subr.mxu0 0.0
      %672 = vmatpush1.msra.mxu0 0.0
      %673 = vmatprep.subr.mxu0 0.0
      %674 = vmatpush1.msra.mxu0 0.0
      %675 = vmatprep.subr.mxu0 0.0
      %676 = vmatpush1.msra.mxu0 0.0
      %677 = vmatprep.subr.mxu0 0.0
      %678 = vmatpush1.msra.mxu0 0.0
      %679 = vmatprep.subr.mxu0 0.0
      %680 = vmatpush1.msra.mxu0 0.0
      %681 = vmatprep.subr.mxu0 0.0
      %682 = vmatpush1.msra.mxu0 0.0
      %683 = vmatprep.subr.mxu0 0.0
      %684 = vmatpush1.msra.mxu0 0.0
      %685 = vmatprep.subr.mxu0 0.0
      %686 = vmatpush1.msra.mxu0 0.0
      %687 = vmatprep.subr.mxu0 0.0
      %688 = vmatpush1.msra.mxu0 0.0
      %689 = vmatprep.mubr.f32.mxu0 0.0
      %690 = vmatmul.mubr.f32.gmra.mrb[0].mxu0 %v609
      %v691 = vpop.f32.mrb[0].mxu0
      %v692 = vadd.f32 0.0, %v691
      %v693 = vpop.f32.mrb[0].mxu0
      %v694 = vadd.f32 0.0, %v693
      %695 = vmatprep.mubr.f32.mxu0 0.0
      %696 = vmatmul.mubr.f32.gmra.mrb[0].mxu0 %v612
      %v697 = vpop.f32.mrb[0].mxu0
      %v698 = vadd.f32 0.0, %v697
      %v699 = vpop.f32.mrb[0].mxu0
      %v700 = vadd.f32 0.0, %v699
      %701 = vmatprep.mubr.f32.mxu0 0.0
      %702 = vmatmul.mubr.f32.gmra.mrb[0].mxu0 %v615
      %v703 = vpop.f32.mrb[0].mxu0
      %v704 = vadd.f32 0.0, %v703
      %v705 = vpop.f32.mrb[0].mxu0
      %v706 = vadd.f32 0.0, %v705
      %707 = vmatprep.mubr.f32.mxu0 0.0
      %708 = vmatmul.mubr.f32.gmra.mrb[0].mxu0 %v618
      %v709 = vpop.f32.mrb[0].mxu0
      %v710 = vadd.f32 0.0, %v709
      %v711 = vpop.f32.mrb[0].mxu0
      %v712 = vadd.f32 0.0, %v711
      %713 = vdwg.mxu0
      %v715 = vcombine.high %v595, %v595
      %v717 = vsel %vm607, %v596, 0
      %v720 = vsel %vm607, %v597, 0
      %v723 = vsel %vm607, %v598, 0
      %v726 = vsel %vm607, %v599, 0
      %v728 = vsel %vm620, %v595, 0
      %v730 = vsel %vm620, %v715, 0
      %732 = vmatprep.subr.mxu0 %v730
      %733 = vmatpush1.msra.mxu0 %v728
      %734 = vmatprep.subr.mxu0 0.0
      %735 = vmatpush1.msra.mxu0 0.0
      %736 = vmatprep.subr.mxu0 0.0
      %737 = vmatpush1.msra.mxu0 0.0
      %738 = vmatprep.subr.mxu0 0.0
      %739 = vmatpush1.msra.mxu0 0.0
      %740 = vmatprep.subr.mxu0 0.0
      %741 = vmatpush1.msra.mxu0 0.0
      %742 = vmatprep.subr.mxu0 0.0
      %743 = vmatpush1.msra.mxu0 0.0
      %744 = vmatprep.subr.mxu0 0.0
      %745 = vmatpush1.msra.mxu0 0.0
      %746 = vmatprep.subr.mxu0 0.0
      %747 = vmatpush1.msra.mxu0 0.0
      %748 = vmatprep.subr.mxu0 0.0
      %749 = vmatpush1.msra.mxu0 0.0
      %750 = vmatprep.subr.mxu0 0.0
      %751 = vmatpush1.msra.mxu0 0.0
      %752 = vmatprep.subr.mxu0 0.0
      %753 = vmatpush1.msra.mxu0 0.0
      %754 = vmatprep.subr.mxu0 0.0
      %755 = vmatpush1.msra.mxu0 0.0
      %756 = vmatprep.subr.mxu0 0.0
      %757 = vmatpush1.msra.mxu0 0.0
      %758 = vmatprep.subr.mxu0 0.0
      %759 = vmatpush1.msra.mxu0 0.0
      %760 = vmatprep.subr.mxu0 0.0
      %761 = vmatpush1.msra.mxu0 0.0
      %762 = vmatprep.subr.mxu0 0.0
      %763 = vmatpush1.msra.mxu0 0.0
      %764 = vmatprep.subr.mxu0 0.0
      %765 = vmatpush1.msra.mxu0 0.0
      %766 = vmatprep.subr.mxu0 0.0
      %767 = vmatpush1.msra.mxu0 0.0
      %768 = vmatprep.subr.mxu0 0.0
      %769 = vmatpush1.msra.mxu0 0.0
      %770 = vmatprep.subr.mxu0 0.0
      %771 = vmatpush1.msra.mxu0 0.0
      %772 = vmatprep.subr.mxu0 0.0
      %773 = vmatpush1.msra.mxu0 0.0
      %774 = vmatprep.subr.mxu0 0.0
      %775 = vmatpush1.msra.mxu0 0.0
      %776 = vmatprep.subr.mxu0 0.0
      %777 = vmatpush1.msra.mxu0 0.0
      %778 = vmatprep.subr.mxu0 0.0
      %779 = vmatpush1.msra.mxu0 0.0
      %780 = vmatprep.subr.mxu0 0.0
      %781 = vmatpush1.msra.mxu0 0.0
      %782 = vmatprep.subr.mxu0 0.0
      %783 = vmatpush1.msra.mxu0 0.0
      %784 = vmatprep.subr.mxu0 0.0
      %785 = vmatpush1.msra.mxu0 0.0
      %786 = vmatprep.subr.mxu0 0.0
      %787 = vmatpush1.msra.mxu0 0.0
      %788 = vmatprep.subr.mxu0 0.0
      %789 = vmatpush1.msra.mxu0 0.0
      %790 = vmatprep.subr.mxu0 0.0
      %791 = vmatpush1.msra.mxu0 0.0
      %792 = vmatprep.subr.mxu0 0.0
      %793 = vmatpush1.msra.mxu0 0.0
      %794 = vmatprep.subr.mxu0 0.0
      %795 = vmatpush1.msra.mxu0 0.0
      %796 = vmatprep.mubr.f32.mxu0 0.0
      %797 = vmatmul.mubr.f32.gmra.mrb[0].mxu0 %v717
      %v798 = vpop.f32.mrb[0].mxu0
      %v799 = vadd.f32 %v692, %v798
      %v800 = vpop.f32.mrb[0].mxu0
      %v801 = vadd.f32 %v694, %v800
      %802 = vmatprep.mubr.f32.mxu0 0.0
      %803 = vmatmul.mubr.f32.gmra.mrb[0].mxu0 %v720
      %v804 = vpop.f32.mrb[0].mxu0
      %v805 = vadd.f32 %v698, %v804
      %v806 = vpop.f32.mrb[0].mxu0
      %v807 = vadd.f32 %v700, %v806
      %808 = vmatprep.mubr.f32.mxu0 0.0
      %809 = vmatmul.mubr.f32.gmra.mrb[0].mxu0 %v723
      %v810 = vpop.f32.mrb[0].mxu0
      %v811 = vadd.f32 %v704, %v810
      %v812 = vpop.f32.mrb[0].mxu0
      %v813 = vadd.f32 %v706, %v812
      %814 = vmatprep.mubr.f32.mxu0 0.0
      %815 = vmatmul.mubr.f32.gmra.mrb[0].mxu0 %v726
      %v816 = vpop.f32.mrb[0].mxu0
      %v817 = vadd.f32 %v710, %v816
      %v818 = vpop.f32.mrb[0].mxu0
      %v819 = vadd.f32 %v712, %v818
      %820 = vdwg.mxu0
      %v821 = vld [vmem:[%s552] sm:$0xff]
      %v822 = vld [vmem:[%s552 + $0x8] sm:$0xff]
      %v823 = vld [vmem:[%s552 + $0x10] sm:$0xff]
      %v824 = vld [vmem:[%s552 + $0x18] sm:$0xff]
      %826 = vset.pattern.permute.xlu0 0
      %827 = vperm.xlu0 %826, %v821
      %v828 = vpop.permute.xlu0 %827
      %831 = vset.pattern.permute.xlu0 0
      %832 = vperm.xlu0 %831, %v822
      %v833 = vpop.permute.xlu0 %832
      %836 = vset.pattern.permute.xlu0 0
      %837 = vperm.xlu0 %836, %v823
      %v838 = vpop.permute.xlu0 %837
      %841 = vset.pattern.permute.xlu0 0
      %842 = vperm.xlu0 %841, %v824
      %v843 = vpop.permute.xlu0 %842
      %v845 = vadd.f32 %v799, %v828
      %v846 = vadd.f32 %v801, %v828
      %v847 = vadd.f32 %v805, %v833
      %v848 = vadd.f32 %v807, %v833
      %v849 = vadd.f32 %v811, %v838
      %v850 = vadd.f32 %v813, %v838
      %v851 = vadd.f32 %v817, %v843
      %v852 = vadd.f32 %v819, %v843
      %v853 = vmax.f32 %v845, 0.0
      %v854 = vmax.f32 %v846, 0.0
      %v855 = vmax.f32 %v847, 0.0
      %v856 = vmax.f32 %v848, 0.0
      %v857 = vmax.f32 %v849, 0.0
      %v858 = vmax.f32 %v850, 0.0
      %v859 = vmax.f32 %v851, 0.0
      %v860 = vmax.f32 %v852, 0.0
      %861 = vst [vmem:[%s587] sm:$0xff] %v853
      %862 = vst [vmem:[%s587 + $0x8] sm:$0xff] %v854
      %863 = vst [vmem:[%s587 + $0x10] sm:$0xff] %v855
      %864 = vst [vmem:[%s587 + $0x18] sm:$0xff] %v856
      %865 = vst [vmem:[%s587 + $0x20] sm:$0xff] %v857
      %866 = vst [vmem:[%s587 + $0x28] sm:$0xff] %v858
      %867 = vst [vmem:[%s587 + $0x30] sm:$0xff] %v859
      %868 = vst [vmem:[%s587 + $0x38] sm:$0xff] %v860
      %v869 = vld [vmem:[%s556] sm:$0xff]
      %v870 = vld [vmem:[%s560] sm:$0xff]
      %872 = vset.pattern.permute.xlu0 0
      %873 = vperm.xlu0 %872, %v870
      %v874 = vpop.permute.xlu0 %873
      %vm876 = vcmask 261120
      %v878 = vsel %vm876, %v869, 0
      %880 = vmatprep.subr.mxu0 %v854
      %881 = vmatpush1.msra.mxu0 %v853
      %882 = vmatprep.subr.mxu0 %v856
      %883 = vmatpush1.msra.mxu0 %v855
      %884 = vmatprep.subr.mxu0 %v858
      %885 = vmatpush1.msra.mxu0 %v857
      %886 = vmatprep.subr.mxu0 %v860
      %887 = vmatpush1.msra.mxu0 %v859
      %888 = vmatprep.subr.mxu0 0.0
      %889 = vmatpush1.msra.mxu0 0.0
      %890 = vmatprep.subr.mxu0 0.0
      %891 = vmatpush1.msra.mxu0 0.0
      %892 = vmatprep.subr.mxu0 0.0
      %893 = vmatpush1.msra.mxu0 0.0
      %894 = vmatprep.subr.mxu0 0.0
      %895 = vmatpush1.msra.mxu0 0.0
      %896 = vmatprep.subr.mxu0 0.0
      %897 = vmatpush1.msra.mxu0 0.0
      %898 = vmatprep.subr.mxu0 0.0
      %899 = vmatpush1.msra.mxu0 0.0
      %900 = vmatprep.subr.mxu0 0.0
      %901 = vmatpush1.msra.mxu0 0.0
      %902 = vmatprep.subr.mxu0 0.0
      %903 = vmatpush1.msra.mxu0 0.0
      %904 = vmatprep.subr.mxu0 0.0
      %905 = vmatpush1.msra.mxu0 0.0
      %906 = vmatprep.subr.mxu0 0.0
      %907 = vmatpush1.msra.mxu0 0.0
      %908 = vmatprep.subr.mxu0 0.0
      %909 = vmatpush1.msra.mxu0 0.0
      %910 = vmatprep.subr.mxu0 0.0
      %911 = vmatpush1.msra.mxu0 0.0
      %912 = vmatprep.subr.mxu0 0.0
      %913 = vmatpush1.msra.mxu0 0.0
      %914 = vmatprep.subr.mxu0 0.0
      %915 = vmatpush1.msra.mxu0 0.0
      %916 = vmatprep.subr.mxu0 0.0
      %917 = vmatpush1.msra.mxu0 0.0
      %918 = vmatprep.subr.mxu0 0.0
      %919 = vmatpush1.msra.mxu0 0.0
      %920 = vmatprep.subr.mxu0 0.0
      %921 = vmatpush1.msra.mxu0 0.0
      %922 = vmatprep.subr.mxu0 0.0
      %923 = vmatpush1.msra.mxu0 0.0
      %924 = vmatprep.subr.mxu0 0.0
      %925 = vmatpush1.msra.mxu0 0.0
      %926 = vmatprep.subr.mxu0 0.0
      %927 = vmatpush1.msra.mxu0 0.0
      %928 = vmatprep.subr.mxu0 0.0
      %929 = vmatpush1.msra.mxu0 0.0
      %930 = vmatprep.subr.mxu0 0.0
      %931 = vmatpush1.msra.mxu0 0.0
      %932 = vmatprep.subr.mxu0 0.0
      %933 = vmatpush1.msra.mxu0 0.0
      %934 = vmatprep.subr.mxu0 0.0
      %935 = vmatpush1.msra.mxu0 0.0
      %936 = vmatprep.subr.mxu0 0.0
      %937 = vmatpush1.msra.mxu0 0.0
      %938 = vmatprep.subr.mxu0 0.0
      %939 = vmatpush1.msra.mxu0 0.0
      %940 = vmatprep.subr.mxu0 0.0
      %941 = vmatpush1.msra.mxu0 0.0
      %942 = vmatprep.subr.mxu0 0.0
      %943 = vmatpush1.msra.mxu0 0.0
      %944 = vmatprep.mubr.f32.mxu0 0.0
      %945 = vmatmul.mubr.f32.gmra.mrb[0].mxu0 %v878
      %v946 = vpop.f32.mrb[0].mxu0
      %v947 = vadd.f32 %v874, %v946
      %v948 = vpop.f32.mrb[0].mxu0
      %v949 = vadd.f32 %v874, %v948
      %950 = vdwg.mxu0
      %951 = vst [vmem:[%s573] sm:$0xff] %v947
      %952 = vst [vmem:[%s573 + $0x8] sm:$0xff] %v949
      %s953 = smul.u32 2, %s27
      %p954 = scmp.lt.s32.totalorder %s28, 1
      %s955 = scalar_select %p954, %s28, 1
      %p956 = scmp.lt.s32.totalorder %s26, 1
      %s957 = scalar_select %p956, %s26, 1
      %p958 = scmp.lt.s32.totalorder %s953, 1
      %s959 = scalar_select %p958, %s953, 1
      %s960 = smul.addr %s957, 2
      %s961 = sadd.s32 %s959, %s960
      %s962 = smul.addr %s955, 4
      %s963 = sadd.s32 %s961, %s962
      %s964 = smul.addr %s963, 8
      %s965 = scalar_lea.vmem %s8, %s964
      %s966 = smul.u32 2, %s27
      %p967 = scmp.lt.s32.totalorder %s28, 1
      %s968 = scalar_select %p967, %s28, 1
      %p969 = scmp.lt.s32.totalorder %s26, 1
      %s970 = scalar_select %p969, %s26, 1
      %p971 = scmp.lt.s32.totalorder %s966, 1
      %s972 = scalar_select %p971, %s966, 1
      %s973 = smul.addr %s970, 8
      %s974 = sadd.s32 %s972, %s973
      %s975 = smul.addr %s968, 16
      %s976 = sadd.s32 %s974, %s975
      %s977 = smul.addr %s976, 8
      %s978 = scalar_lea.vmem %s9, %s977
      // Predicated region
      $region53: #{_mean_teacher_step.1} parent=51 // pred_check
        %p979 = pneg %p276
      $region54: #{_mean_teacher_step.1} parent=51 // pred_check_branch
        %981 = sbr.rel (%p979) target = $region56
      $region55: #{_mean_teacher_step.1} parent=51 // pred_region
        %s982 = smul.u32 2, %s27
      $region56: #{_mean_teacher_step.1} parent=51 // pred_fallthru
        _
      // Predicated region
      $region57: #{_mean_teacher_step.1} parent=51 // pred_check
        %p983 = pneg %p306
      $region58: #{_mean_teacher_step.1} parent=51 // pred_check_branch
        %985 = sbr.rel (%p983) target = $region60
      $region59: #{_mean_teacher_step.1} parent=51 // pred_region
        %s986 = smul.u32 2, %s27
      $region60: #{_mean_teacher_step.1} parent=51 // pred_fallthru
        _
    $region52: #{_mean_teacher_step.1} parent=5 // pred_fallthru
      _
    %p987 = scmp.le.s32.totalorder 2, %s16
    // Predicated region
    $region61: #{_mean_teacher_step.1} parent=5 // pred_check
      %p988 = pneg %p987
    $region62: #{_mean_teacher_step.1} parent=5 // pred_check_branch
      %990 = sbr.rel (%p988) target = $region64
    $region63: #{_mean_teacher_step.1} parent=5 // pred_region
      %s991 = ssub.s32 %s16, 2
      // Predicated region
      $region65: #{_mean_teacher_step.1} parent=63 // pred_check
        %p992 = pneg %p282
      $region66: #{_mean_teacher_step.1} parent=63 // pred_check_branch
        %994 = sbr.rel (%p992) target = $region68
      $region67: #{_mean_teacher_step.1} parent=63 // pred_region
        %s995 = smul.u32 2, %s30
        %p996 = scmp.lt.s32.totalorder %s31, 1
        %s997 = scalar_select %p996, %s31, 1
        %p998 = scmp.lt.s32.totalorder %s29, 1
        %s999 = scalar_select %p998, %s29, 1
        %p1000 = scmp.lt.s32.totalorder %s995, 1
        %s1001 = scalar_select %p1000, %s995, 1
        %s1002 = smul.addr %s999, 2
        %s1003 = sadd.s32 %s1001, %s1002
        %s1004 = smul.addr %s997, 4
        %s1005 = sadd.s32 %s1003, %s1004
        %s1006 = smul.addr %s1005, 8
        %s1007 = scalar_lea.vmem %s8, %s1006
      $region68: #{_mean_teacher_step.1} parent=63 // pred_fallthru
        _
      // Predicated region
      $region69: #{_mean_teacher_step.1} parent=63 // pred_check
        %p1008 = pneg %p312
      $region70: #{_mean_teacher_step.1} parent=63 // pred_check_branch
        %1010 = sbr.rel (%p1008) target = $region72
      $region71: #{_mean_teacher_step.1} parent=63 // pred_region
        %s1011 = smul.u32 2, %s30
        %p1012 = scmp.lt.s32.totalorder %s31, 1
        %s1013 = scalar_select %p1012, %s31, 1
        %p1014 = scmp.lt.s32.totalorder %s29, 1
        %s1015 = scalar_select %p1014, %s29, 1
        %p1016 = scmp.lt.s32.totalorder %s1011, 1
        %s1017 = scalar_select %p1016, %s1011, 1
        %s1018 = smul.addr %s1015, 8
        %s1019 = sadd.s32 %s1017, %s1018
        %s1020 = smul.addr %s1013, 16
        %s1021 = sadd.s32 %s1019, %s1020
        %s1022 = smul.addr %s1021, 8
        %s1023 = scalar_lea.vmem %s9, %s1022
      $region72: #{_mean_teacher_step.1} parent=63 // pred_fallthru
        _
    $region64: #{_mean_teacher_step.1} parent=5 // pred_fallthru
      _
  $region6: #{_mean_teacher_step.1} parent=0 // loop_footer
    %s20 = sadd.s32 1, %s16
  $region7: #{_mean_teacher_step.1} parent=0 // loop_footer_branch
    %15 = sbr.rel target = $region3
  $region8: #{_mean_teacher_step.1} parent=0 // loop_exit
    _

</llo_original>
